<compile_context>
chip_gen: v5e
topology: v5e:2x2
jax: 0.10.0
libtpu: 0.0.40
codegen_flags: <defaults>
</compile_context>

<pallas_src>
import functools

import jax
import jax.numpy as jnp
from jax.experimental import pallas as pl
from jax.experimental.pallas import tpu as pltpu


def _deepfm_kernel(idx_ref, s_ref, b1c_ref, w2t_ref, b2c_ref, w3c_ref, bias_ref,
                   out_ref, *, n_fields, h1, emb_dim):
    # idx_ref : (F, TB)        int32  -- global vocab ids, batch on lanes
    # s_ref   : (R_pad, V_pad) f32    -- stacked [W1emb ; embt ; embt^2 ; lin_row]
    # b1c_ref : (H1, 1)  w2t_ref: (H2, H1)  b2c_ref: (H2, 1)  w3c_ref: (H2, 1)
    # bias_ref: (1, 1)         f32    -- FeaturesLinear bias + output-layer bias
    # out_ref : (1, TB)        f32
    v_pad = s_ref.shape[1]
    tb = idx_ref.shape[1]

    # ---- single multi-hot matrix (V_pad, TB): one hot row per field per column
    iota_v = jax.lax.broadcasted_iota(jnp.int32, (v_pad, tb), 0)
    multi_hot = jnp.zeros((v_pad, tb), jnp.float32)
    for f in range(n_fields):                                 # static & small
        idx_row = idx_ref[pl.ds(f, 1), :]                     # (1, TB)
        multi_hot = multi_hot + jnp.where(iota_v == idx_row, 1.0, 0.0)
    # TODO(synk): add pl.debug_check(idx < V) under enable_debug_checks for OOB ids.

    # ---- ONE fused MXU push: gather + FM sums + MLP layer-1 + FeaturesLinear
    y = jnp.dot(s_ref[...], multi_hot,
                preferred_element_type=jnp.float32)           # (R_pad, TB)
    z1_pre = y[0:h1]                                          # (H1, TB)
    sum_f = y[h1:h1 + emb_dim]                                # (E,  TB)
    sum_sq = y[h1 + emb_dim:h1 + 2 * emb_dim]                 # (E,  TB)
    y_lin = y[h1 + 2 * emb_dim:h1 + 2 * emb_dim + 1]          # (1,  TB)

    # ---- MLP (BatchNorm folded into weights in the wrapper; eval Dropout = id)
    z1 = jnp.maximum(z1_pre + b1c_ref[...], 0.0)              # (H1, TB)
    z2 = jnp.maximum(jnp.dot(w2t_ref[...], z1,
                             preferred_element_type=jnp.float32)
                     + b2c_ref[...], 0.0)                     # (H2, TB)
    # N=1 output matmul replaced by VPU multiply + sublane reduce
    y_mlp = jnp.sum(z2 * w3c_ref[...], axis=0, keepdims=True)  # (1, TB)

    # ---- FactorizationMachine second-order term
    y_fm = 0.5 * (jnp.sum(sum_f * sum_f, axis=0, keepdims=True)
                  - jnp.sum(sum_sq, axis=0, keepdims=True))   # (1, TB)

    out_ref[...] = jax.nn.sigmoid(y_mlp + y_fm + y_lin + bias_ref[...])


def _pick_tile(batch, tile_b):
    """Big tiles amortize per-step grid overhead, but keep >=2 (and preferably
    an even number of) grid steps so both v7x TensorCores stay busy."""
    tile_b = max(128, (int(tile_b) // 128) * 128)
    tile_b = min(tile_b, 128 * pl.cdiv(batch, 128))           # no useless padding
    if batch > 128:
        tile_b = min(tile_b, 128 * pl.cdiv(pl.cdiv(batch, 2), 128))  # >= 2 steps
    nt = pl.cdiv(batch, tile_b)
    if nt > 2 and nt % 2 == 1:                                # prefer even step count
        tile_b = max(128, 128 * pl.cdiv(pl.cdiv(batch, nt + 1), 128))
    return tile_b


def deepfm_forward(x, params, tile_b=512):
    """x: (B, F) int32 per-field categorical indices. Returns (B,) f32 probs."""
    offsets = params["offsets"]                               # (F,)
    idx = (x + offsets[None, :]).astype(jnp.int32)            # (B, F) global ids
    B, F = idx.shape
    V, E = params["emb_table"].shape
    H1 = params["w1"].shape[1]

    # ---- fold eval-mode BatchNorm into the Linear layers, transpose for the
    # batch-on-lanes layout used inside the kernel.
    w1f = params["w1"] * params["s1"]
    b1f = params["b1"] * params["s1"] + params["t1"]
    w2f = params["w2"] * params["s2"]
    b2f = params["b2"] * params["s2"] + params["t2"]
    w1t, b1c = w1f.T, b1f.T                                   # (H1, F*E), (H1, 1)
    w2t, b2c = w2f.T, b2f.T                                   # (H2, H1),  (H2, 1)
    w3c = params["w3"]                                        # (H2, 1)
    emb_t = params["emb_table"].T                             # (E, V)

    # ---- precompute the stacked matrix S (fused gather / FM / layer-1 / linear)
    # W1emb[:, v] = w1t[:, field(v)*E:(field(v)+1)*E] @ embt[:, v]
    field_id = jnp.searchsorted(offsets, jnp.arange(V, dtype=offsets.dtype),
                                side="right") - 1             # (V,)
    field_onehot = (field_id[None, :]
                    == jnp.arange(F, dtype=field_id.dtype)[:, None]
                    ).astype(jnp.float32)                     # (F, V)
    w1emb = jnp.einsum("hfe,ev,fv->hv",
                       w1t.reshape(H1, F, E), emb_t, field_onehot)  # (H1, V)

    v_pad = 128 * pl.cdiv(V, 128)                             # lane alignment
    rows = H1 + 2 * E + 1
    r_pad = 8 * pl.cdiv(rows, 8)                              # sublane alignment
    s_mat = jnp.zeros((r_pad, v_pad), jnp.float32)
    s_mat = s_mat.at[0:H1, 0:V].set(w1emb)
    s_mat = s_mat.at[H1:H1 + E, 0:V].set(emb_t)
    s_mat = s_mat.at[H1 + E:H1 + 2 * E, 0:V].set(emb_t * emb_t)
    s_mat = s_mat.at[H1 + 2 * E, 0:V].set(params["lin_table"][:, 0])

    bias_total = (params["bias"] + params["b3"]).reshape(1, 1)

    # ---- batch tiling (pad to a multiple of the tile; padded rows discarded)
    tile_b = _pick_tile(B, tile_b)
    num_tiles = pl.cdiv(B, tile_b)
    Bp = num_tiles * tile_b
    idx_t = jnp.pad(idx.T, ((0, 0), (0, Bp - B)))             # (F, Bp)

    kernel = functools.partial(_deepfm_kernel, n_fields=F, h1=H1, emb_dim=E)
    const = lambda i: (0, 0)
    out = pl.pallas_call(
        kernel,
        out_shape=jax.ShapeDtypeStruct((1, Bp), jnp.float32),
        grid=(num_tiles,),
        in_specs=[
            pl.BlockSpec((F, tile_b), lambda i: (0, i)),      # indices (per tile)
            pl.BlockSpec(s_mat.shape, const),                 # resident stacked weights
            pl.BlockSpec(b1c.shape, const),
            pl.BlockSpec(w2t.shape, const),
            pl.BlockSpec(b2c.shape, const),
            pl.BlockSpec(w3c.shape, const),
            pl.BlockSpec(bias_total.shape, const),
        ],
        out_specs=pl.BlockSpec((1, tile_b), lambda i: (0, i)),  # lane-dense output
        compiler_params=pltpu.CompilerParams(
            dimension_semantics=("parallel",)),
    )(idx_t, s_mat, b1c, w2t, b2c, w3c, bias_total)
    return out[0, :B]                                         # == sigmoid(y).squeeze(1)


def deepfm_reference(x, params):
    """Pure-JAX reference mirroring the PyTorch forward (eval mode)."""
    offsets = params["offsets"]
    idx = x + offsets[None, :]
    embed = jnp.take(params["emb_table"], idx, axis=0)        # (B, F, E)
    lin = jnp.take(params["lin_table"], idx, axis=0)[..., 0]  # (B, F)

    y_linear = jnp.sum(lin, axis=1, keepdims=True) + params["bias"][0, 0]
    sum_f = jnp.sum(embed, axis=1)
    sum_sq = jnp.sum(embed ** 2, axis=1)
    y_fm = 0.5 * jnp.sum(sum_f ** 2 - sum_sq, axis=-1, keepdims=True)

    B = x.shape[0]
    h = embed.reshape(B, -1)
    h = jnp.maximum((h @ params["w1"] + params["b1"]) * params["s1"] + params["t1"], 0.0)
    h = jnp.maximum((h @ params["w2"] + params["b2"]) * params["s2"] + params["t2"], 0.0)
    y_mlp = h @ params["w3"] + params["b3"]
    return jax.nn.sigmoid((y_linear + y_fm + y_mlp)[:, 0])


def init_params(field_dims, embed_dim, hidden_dims, key):
    assert len(hidden_dims) == 2, "this script wires a 2-hidden-layer MLP"
    vocab = int(sum(field_dims))
    F = len(field_dims)
    d_in = F * embed_dim
    h1, h2 = hidden_dims
    ks = jax.random.split(key, 8)

    offsets = jnp.asarray(
        [0] + list(jnp.cumsum(jnp.asarray(field_dims))[:-1]), dtype=jnp.int32)

    params = {
        "offsets": offsets,
        "emb_table": 0.1 * jax.random.normal(ks[0], (vocab, embed_dim), jnp.float32),
        "lin_table": 0.1 * jax.random.normal(ks[1], (vocab, 1), jnp.float32),
        "bias": jnp.zeros((1, 1), jnp.float32),
        # MLP layer 1
        "w1": 0.1 * jax.random.normal(ks[2], (d_in, h1), jnp.float32),
        "b1": 0.01 * jax.random.normal(ks[3], (1, h1), jnp.float32),
        # BatchNorm1d(h1) at init (eval): gamma=1, beta=0, mean=0, var=1 -> folded
        "s1": jnp.ones((1, h1), jnp.float32) / jnp.sqrt(1.0 + 1e-5),
        "t1": jnp.zeros((1, h1), jnp.float32),
        # MLP layer 2
        "w2": 0.1 * jax.random.normal(ks[4], (h1, h2), jnp.float32),
        "b2": 0.01 * jax.random.normal(ks[5], (1, h2), jnp.float32),
        "s2": jnp.ones((1, h2), jnp.float32) / jnp.sqrt(1.0 + 1e-5),
        "t2": jnp.zeros((1, h2), jnp.float32),
        # Output layer
        "w3": 0.1 * jax.random.normal(ks[6], (h2, 1), jnp.float32),
        "b3": 0.01 * jax.random.normal(ks[7], (1, 1), jnp.float32),
    }
    return params


if __name__ == "__main__":
    field_dims = [10, 20, 30, 40]      # 4 fields, total vocab 100
    embed_dim = 16
    hidden_dims = (32, 16)
    dropout = 0.2                      # eval mode -> identity
    B = 512                            # -> tile_b=256, 2 grid steps (even, v7x-friendly)

    root = jax.random.PRNGKey(0)
    k_x, k_p = jax.random.split(root)
    params = init_params(field_dims, embed_dim, hidden_dims, k_p)

    maxes = jnp.asarray(field_dims, dtype=jnp.int32)
    x = (jax.random.randint(k_x, (B, len(field_dims)), 0, 1 << 20) % maxes
         ).astype(jnp.int32)

    out = jax.jit(deepfm_forward)(x, params)
    out = jax.block_until_ready(out)

    ref = deepfm_reference(x, params)
    assert out.shape == (B,)
    err = float(jnp.max(jnp.abs(out - ref)))
    assert jnp.allclose(out, ref, atol=1e-4, rtol=1e-4), err
    print("KERNEL_OK")
</pallas_src>

<mosaic_0001>
module attributes {stable_mosaic.version = 11 : i64} {
  func.func @_deepfm_kernel(%arg0: i32, %arg1: memref<4x256xi32, #tpu.memory_space<vmem>>, %arg2: memref<72x128xf32, #tpu.memory_space<vmem>>, %arg3: memref<32x1xf32, #tpu.memory_space<vmem>>, %arg4: memref<16x32xf32, #tpu.memory_space<vmem>>, %arg5: memref<16x1xf32, #tpu.memory_space<vmem>>, %arg6: memref<16x1xf32, #tpu.memory_space<vmem>>, %arg7: memref<1x1xf32, #tpu.memory_space<vmem>>, %arg8: memref<1x256xf32, #tpu.memory_space<vmem>>) attributes {dimension_semantics = [#tpu.dimension_semantics<parallel>], iteration_bounds = array<i64: 2>, scalar_prefetch = 0 : i64, scratch_operands = 0 : i64, tpu.core_type = #tpu.core_type<tc>, window_params = [{transform_indices = @transform_0, window_bounds = array<i64: 4, 256>}, {pipeline_mode = #tpu.pipeline_mode<synchronous>, transform_indices = @transform_1, window_bounds = array<i64: 72, 128>}, {pipeline_mode = #tpu.pipeline_mode<synchronous>, transform_indices = @transform_2, window_bounds = array<i64: 32, 1>}, {pipeline_mode = #tpu.pipeline_mode<synchronous>, transform_indices = @transform_3, window_bounds = array<i64: 16, 32>}, {pipeline_mode = #tpu.pipeline_mode<synchronous>, transform_indices = @transform_4, window_bounds = array<i64: 16, 1>}, {pipeline_mode = #tpu.pipeline_mode<synchronous>, transform_indices = @transform_5, window_bounds = array<i64: 16, 1>}, {pipeline_mode = #tpu.pipeline_mode<synchronous>, transform_indices = @transform_6, window_bounds = array<i64: 1, 1>}, {transform_indices = @transform_7, window_bounds = array<i64: 1, 256>}]} {
    %0 = tpu.iota {dimensions = array<i32: 0>} : vector<128x256xi32>
    %cst = arith.constant 0.000000e+00 : f32
    %1 = vector.broadcast %cst : f32 to vector<128x256xf32>
    %c0 = arith.constant 0 : index
    %c0_0 = arith.constant 0 : index
    %2 = vector.load %arg1[%c0, %c0_0] : memref<4x256xi32, #tpu.memory_space<vmem>>, vector<1x256xi32>
    %3 = vector.broadcast %2 : vector<1x256xi32> to vector<128x256xi32>
    %4 = arith.cmpi eq, %0, %3 : vector<128x256xi32>
    %cst_1 = arith.constant 1.000000e+00 : f32
    %cst_2 = arith.constant 0.000000e+00 : f32
    %5 = vector.broadcast %cst_1 : f32 to vector<128x256xf32>
    %6 = vector.broadcast %cst_2 : f32 to vector<128x256xf32>
    %7 = arith.select %4, %5, %6 : vector<128x256xi1>, vector<128x256xf32>
    %8 = arith.addf %1, %7 : vector<128x256xf32>
    %c1 = arith.constant 1 : index
    %c0_3 = arith.constant 0 : index
    %9 = vector.load %arg1[%c1, %c0_3] : memref<4x256xi32, #tpu.memory_space<vmem>>, vector<1x256xi32>
    %10 = vector.broadcast %9 : vector<1x256xi32> to vector<128x256xi32>
    %11 = arith.cmpi eq, %0, %10 : vector<128x256xi32>
    %cst_4 = arith.constant 1.000000e+00 : f32
    %cst_5 = arith.constant 0.000000e+00 : f32
    %12 = vector.broadcast %cst_4 : f32 to vector<128x256xf32>
    %13 = vector.broadcast %cst_5 : f32 to vector<128x256xf32>
    %14 = arith.select %11, %12, %13 : vector<128x256xi1>, vector<128x256xf32>
    %15 = arith.addf %8, %14 : vector<128x256xf32>
    %c2 = arith.constant 2 : index
    %c0_6 = arith.constant 0 : index
    %16 = vector.load %arg1[%c2, %c0_6] : memref<4x256xi32, #tpu.memory_space<vmem>>, vector<1x256xi32>
    %17 = vector.broadcast %16 : vector<1x256xi32> to vector<128x256xi32>
    %18 = arith.cmpi eq, %0, %17 : vector<128x256xi32>
    %cst_7 = arith.constant 1.000000e+00 : f32
    %cst_8 = arith.constant 0.000000e+00 : f32
    %19 = vector.broadcast %cst_7 : f32 to vector<128x256xf32>
    %20 = vector.broadcast %cst_8 : f32 to vector<128x256xf32>
    %21 = arith.select %18, %19, %20 : vector<128x256xi1>, vector<128x256xf32>
    %22 = arith.addf %15, %21 : vector<128x256xf32>
    %c3 = arith.constant 3 : index
    %c0_9 = arith.constant 0 : index
    %23 = vector.load %arg1[%c3, %c0_9] : memref<4x256xi32, #tpu.memory_space<vmem>>, vector<1x256xi32>
    %24 = vector.broadcast %23 : vector<1x256xi32> to vector<128x256xi32>
    %25 = arith.cmpi eq, %0, %24 : vector<128x256xi32>
    %cst_10 = arith.constant 1.000000e+00 : f32
    %cst_11 = arith.constant 0.000000e+00 : f32
    %26 = vector.broadcast %cst_10 : f32 to vector<128x256xf32>
    %27 = vector.broadcast %cst_11 : f32 to vector<128x256xf32>
    %28 = arith.select %25, %26, %27 : vector<128x256xi1>, vector<128x256xf32>
    %29 = arith.addf %22, %28 : vector<128x256xf32>
    %c0_12 = arith.constant 0 : index
    %c0_13 = arith.constant 0 : index
    %30 = vector.load %arg2[%c0_12, %c0_13] : memref<72x128xf32, #tpu.memory_space<vmem>>, vector<72x128xf32>
    %cst_14 = arith.constant dense<0.000000e+00> : vector<72x256xf32>
    %31 = tpu.matmul %30, %29, %cst_14 {dimension_numbers = #tpu.dot_dimension_numbers<[1], [0], [0], [1], [0, 0, 1, 1], [], []>} : vector<72x128xf32>, vector<128x256xf32>, vector<72x256xf32> -> vector<72x256xf32>
    %32 = vector.extract_strided_slice %31 {offsets = [0, 0], sizes = [32, 256], strides = [1, 1]} : vector<72x256xf32> to vector<32x256xf32>
    %33 = vector.extract_strided_slice %31 {offsets = [32, 0], sizes = [16, 256], strides = [1, 1]} : vector<72x256xf32> to vector<16x256xf32>
    %34 = vector.extract_strided_slice %31 {offsets = [48, 0], sizes = [16, 256], strides = [1, 1]} : vector<72x256xf32> to vector<16x256xf32>
    %35 = vector.extract_strided_slice %31 {offsets = [64, 0], sizes = [1, 256], strides = [1, 1]} : vector<72x256xf32> to vector<1x256xf32>
    %c0_15 = arith.constant 0 : index
    %c0_16 = arith.constant 0 : index
    %36 = vector.load %arg3[%c0_15, %c0_16] : memref<32x1xf32, #tpu.memory_space<vmem>>, vector<32x1xf32>
    %37 = vector.broadcast %36 : vector<32x1xf32> to vector<32x256xf32>
    %38 = arith.addf %32, %37 : vector<32x256xf32>
    %cst_17 = arith.constant 0.000000e+00 : f32
    %39 = vector.broadcast %cst_17 : f32 to vector<32x256xf32>
    %40 = arith.maximumf %38, %39 : vector<32x256xf32>
    %c0_18 = arith.constant 0 : index
    %c0_19 = arith.constant 0 : index
    %41 = vector.load %arg4[%c0_18, %c0_19] : memref<16x32xf32, #tpu.memory_space<vmem>>, vector<16x32xf32>
    %cst_20 = arith.constant dense<0.000000e+00> : vector<16x256xf32>
    %42 = tpu.matmul %41, %40, %cst_20 {dimension_numbers = #tpu.dot_dimension_numbers<[1], [0], [0], [1], [0, 0, 1, 1], [], []>} : vector<16x32xf32>, vector<32x256xf32>, vector<16x256xf32> -> vector<16x256xf32>
    %c0_21 = arith.constant 0 : index
    %c0_22 = arith.constant 0 : index
    %43 = vector.load %arg5[%c0_21, %c0_22] : memref<16x1xf32, #tpu.memory_space<vmem>>, vector<16x1xf32>
    %44 = vector.broadcast %43 : vector<16x1xf32> to vector<16x256xf32>
    %45 = arith.addf %42, %44 : vector<16x256xf32>
    %cst_23 = arith.constant 0.000000e+00 : f32
    %46 = vector.broadcast %cst_23 : f32 to vector<16x256xf32>
    %47 = arith.maximumf %45, %46 : vector<16x256xf32>
    %c0_24 = arith.constant 0 : index
    %c0_25 = arith.constant 0 : index
    %48 = vector.load %arg6[%c0_24, %c0_25] : memref<16x1xf32, #tpu.memory_space<vmem>>, vector<16x1xf32>
    %49 = vector.broadcast %48 : vector<16x1xf32> to vector<16x256xf32>
    %50 = arith.mulf %47, %49 : vector<16x256xf32>
    %cst_26 = arith.constant dense<0.000000e+00> : vector<256xf32>
    %51 = vector.multi_reduction <add>, %50, %cst_26 [0] : vector<16x256xf32> to vector<256xf32>
    %52 = vector.shape_cast %51 : vector<256xf32> to vector<1x256xf32>
    %53 = arith.mulf %33, %33 : vector<16x256xf32>
    %cst_27 = arith.constant dense<0.000000e+00> : vector<256xf32>
    %54 = vector.multi_reduction <add>, %53, %cst_27 [0] : vector<16x256xf32> to vector<256xf32>
    %55 = vector.shape_cast %54 : vector<256xf32> to vector<1x256xf32>
    %cst_28 = arith.constant dense<0.000000e+00> : vector<256xf32>
    %56 = vector.multi_reduction <add>, %34, %cst_28 [0] : vector<16x256xf32> to vector<256xf32>
    %57 = vector.shape_cast %56 : vector<256xf32> to vector<1x256xf32>
    %58 = arith.subf %55, %57 : vector<1x256xf32>
    %cst_29 = arith.constant 5.000000e-01 : f32
    %59 = vector.broadcast %cst_29 : f32 to vector<1x256xf32>
    %60 = arith.mulf %59, %58 : vector<1x256xf32>
    %61 = arith.addf %52, %60 : vector<1x256xf32>
    %62 = arith.addf %61, %35 : vector<1x256xf32>
    %c0_30 = arith.constant 0 : index
    %c0_31 = arith.constant 0 : index
    %63 = vector.load %arg7[%c0_30, %c0_31] : memref<1x1xf32, #tpu.memory_space<vmem>>, vector<1x1xf32>
    %64 = vector.broadcast %63 : vector<1x1xf32> to vector<1x256xf32>
    %65 = arith.addf %62, %64 : vector<1x256xf32>
    %66 = arith.negf %65 : vector<1x256xf32>
    %67 = math.exp %66 : vector<1x256xf32>
    %cst_32 = arith.constant 1.000000e+00 : f32
    %68 = vector.broadcast %cst_32 : f32 to vector<1x256xf32>
    %69 = arith.addf %68, %67 : vector<1x256xf32>
    %70 = arith.divf %68, %69 : vector<1x256xf32>
    %c0_33 = arith.constant 0 : index
    %c0_34 = arith.constant 0 : index
    %71 = vector.load %arg8[%c0_33, %c0_34] : memref<1x256xf32, #tpu.memory_space<vmem>>, vector<1x256xf32>
    tpu.vector_store %arg8[%c0_33, %c0_34], %70 {strides = array<i32>} : memref<1x256xf32, #tpu.memory_space<vmem>>, vector<1x256xf32>,
    return
  }
  func.func @transform_0(%arg0: i32) -> (i32, i32) {
    %c0_i32 = arith.constant 0 : i32
    %c0_i32_0 = arith.constant 0 : i32
    return %c0_i32, %arg0 : i32, i32
  }
  func.func @transform_1(%arg0: i32) -> (i32, i32) {
    %c0_i32 = arith.constant 0 : i32
    %c0_i32_0 = arith.constant 0 : i32
    %c0_i32_1 = arith.constant 0 : i32
    return %c0_i32, %c0_i32_0 : i32, i32
  }
  func.func @transform_2(%arg0: i32) -> (i32, i32) {
    %c0_i32 = arith.constant 0 : i32
    %c0_i32_0 = arith.constant 0 : i32
    %c0_i32_1 = arith.constant 0 : i32
    return %c0_i32, %c0_i32_0 : i32, i32
  }
  func.func @transform_3(%arg0: i32) -> (i32, i32) {
    %c0_i32 = arith.constant 0 : i32
    %c0_i32_0 = arith.constant 0 : i32
    %c0_i32_1 = arith.constant 0 : i32
    return %c0_i32, %c0_i32_0 : i32, i32
  }
  func.func @transform_4(%arg0: i32) -> (i32, i32) {
    %c0_i32 = arith.constant 0 : i32
    %c0_i32_0 = arith.constant 0 : i32
    %c0_i32_1 = arith.constant 0 : i32
    return %c0_i32, %c0_i32_0 : i32, i32
  }
  func.func @transform_5(%arg0: i32) -> (i32, i32) {
    %c0_i32 = arith.constant 0 : i32
    %c0_i32_0 = arith.constant 0 : i32
    %c0_i32_1 = arith.constant 0 : i32
    return %c0_i32, %c0_i32_0 : i32, i32
  }
  func.func @transform_6(%arg0: i32) -> (i32, i32) {
    %c0_i32 = arith.constant 0 : i32
    %c0_i32_0 = arith.constant 0 : i32
    %c0_i32_1 = arith.constant 0 : i32
    return %c0_i32, %c0_i32_0 : i32, i32
  }
  func.func @transform_7(%arg0: i32) -> (i32, i32) {
    %c0_i32 = arith.constant 0 : i32
    %c0_i32_0 = arith.constant 0 : i32
    return %c0_i32, %arg0 : i32, i32
  }
}

</mosaic_0001>

<llo_original>
// kernel: custom-call
$region0: #{custom-call}
  %s0 = inlined_call_operand.vmem [shape: u32[100], index: 0, kind: output, shape index: {}]

// kernel: deepfm_forward.1
$region0: #{deepfm_forward.1}
  #allocation0 [shape = 'u32[]', space=smem, size = 0x4, offset = 0x4, fixed_abs, tag = 'smem constant byte address 0x4 - core index']
  #allocation1 [shape = 'u32[72,128]{1,0:T(1,128)}', space=vmem, size = 0x9000, scoped, tag = 'internal scratch']
  #allocation2 [shape = 'f32[1,1]{1,0:T(1,128)S(1)}', space=vmem, size = 0x200, scoped, tag = 'scoped memory for deepfm_forward.1']
  %s0 = inlined_call_operand.vmem [shape: s32[4,512], index: 0, kind: input, shape index: {}]
  %s1 = inlined_call_operand.vmem [shape: f32[72,128], index: 1, kind: input, shape index: {}]
  %s2 = inlined_call_operand.vmem [shape: f32[32,1], index: 2, kind: input, shape index: {}]
  %s3 = inlined_call_operand.vmem [shape: f32[16,32], index: 3, kind: input, shape index: {}]
  %s4 = inlined_call_operand.vmem [shape: f32[16,1], index: 4, kind: input, shape index: {}]
  %s5 = inlined_call_operand.vmem [shape: f32[16,1], index: 5, kind: input, shape index: {}]
  %s6 = inlined_call_operand.<no memory space> [shape: f32[1,1], index: 6, kind: input, shape index: {}]
  %s7 = inlined_call_operand.hbm [shape: f32[1,512], index: 7, kind: output, shape index: {}]
  %s8 = sld [smem:[#allocation0]]
  $region61: #{deepfm_forward.1} parent=0
    _
  %s10 = ssub.s32 1, %s8
  %s11 = scalar_select 0, %s10, %s8
  %v12 = vstv %s6
  %13 = vst [vmem:[#allocation2] sm:$0x1] %v12
  $region1: #{deepfm_forward.1} parent=0
    #allocation3 [shape = 'u8[2048]{0}', space=vmem, size = 0x800, scoped, tag = 'output window, operand 0']
    #allocation4 [shape = 's32[2]{0}', space=sflag, size = 0x8, scoped, tag = 'scoped memory for deepfm_forward.1']
    %14 = vsyncpa [#allocation4], 0
    %s15 = scalar_lea.sflag [#allocation4], 1
    %16 = vsyncpa %s15, 0
    loop: start=0, step=1, limit=4
    $region2: #{deepfm_forward.1} parent=1 // loop_pre_header
      _
    $region3: #{deepfm_forward.1} parent=1 // loop_header
      %s18 = sphi 0, %s22
      %p19 = scmp.ge.s32.totalorder %s18, 4
      %s28 = sphi 0, %s30
      %s31 = sphi 0, %s28
      %s32 = sphi 0, %s31
      %s48 = sphi 0, %s32
      %s52 = sphi 0, %s52
      %s54 = sphi 0, %s52
      %s55 = sphi 0, %s54
      %s69 = sphi 0, %s55
      %s73 = sphi 0, %s73
      %s75 = sphi 0, %s73
      %s76 = sphi 0, %s75
      %s90 = sphi 0, %s76
      %s94 = sphi 0, %s94
      %s96 = sphi 0, %s94
      %s97 = sphi 0, %s96
      %s111 = sphi 0, %s97
      %s115 = sphi 0, %s115
      %s117 = sphi 0, %s115
      %s118 = sphi 0, %s117
      %s132 = sphi 0, %s118
      %s136 = sphi 0, %s136
      %s138 = sphi 0, %s136
      %s139 = sphi 0, %s138
      %s153 = sphi 0, %s139
      %s157 = sphi 0, %s157
      %s159 = sphi 0, %s157
      %s160 = sphi 0, %s159
      %s174 = sphi 0, %s160
      %s180 = sphi 0, %s182
      %s183 = sphi 0, %s180
      %s184 = sphi 0, %s183
      %s200 = sphi 0, %s184
    $region4: #{deepfm_forward.1} parent=1 // loop_header_branch
      %21 = sbr.rel (%p19) target = $region8
    $region5: #{deepfm_forward.1} parent=1 // loop_body
      %s23 = ssub.s32 %s18, 1
      %s24 = ssub.s32 %s18, 2
      %s25 = sadd.s32 %s18, 1
      %s26 = ssub.s32 %s18, %s25
      %p27 = scmp.eq.s32.totalorder %s26, 0
      %s29 = sadd.s32 %s28, 1
      %s30 = scalar_select %p27, %s28, %s29
      %p33 = pneg %p27
      %p34 = scmp.eq.s32.totalorder %s18, 1
      %p35 = por %p33, %p34
      %p36 = scmp.ne.s32.totalorder %s28, %s31
      %p37 = scmp.eq.s32.totalorder %s18, 0
      %p38 = por %p36, %p37
      %p39 = scmp.ne.s32.totalorder %s28, %s31
      %p40 = scmp.eq.s32.totalorder %s23, 1
      %p41 = por %p39, %p40
      %p42 = scmp.ne.s32.totalorder %s31, %s32
      %p43 = scmp.eq.s32.totalorder %s23, 0
      %p44 = por %p42, %p43
      %p45 = scmp.ne.s32.totalorder %s31, %s32
      %p46 = scmp.eq.s32.totalorder %s24, 1
      %p47 = por %p45, %p46
      %p49 = scmp.ne.s32.totalorder %s32, %s48
      %p50 = scmp.eq.s32.totalorder %s24, 0
      %p51 = por %p49, %p50
      %s53 = sadd.s32 %s52, 1
      %p56 = scmp.eq.s32.totalorder %s18, 1
      %p57 = scmp.ne.s32.totalorder %s52, %s54
      %p58 = scmp.eq.s32.totalorder %s18, 0
      %p59 = por %p57, %p58
      %p60 = scmp.ne.s32.totalorder %s52, %s54
      %p61 = scmp.eq.s32.totalorder %s23, 1
      %p62 = por %p60, %p61
      %p63 = scmp.ne.s32.totalorder %s54, %s55
      %p64 = scmp.eq.s32.totalorder %s23, 0
      %p65 = por %p63, %p64
      %p66 = scmp.ne.s32.totalorder %s54, %s55
      %p67 = scmp.eq.s32.totalorder %s24, 1
      %p68 = por %p66, %p67
      %p70 = scmp.ne.s32.totalorder %s55, %s69
      %p71 = scmp.eq.s32.totalorder %s24, 0
      %p72 = por %p70, %p71
      %s74 = sadd.s32 %s73, 1
      %p77 = scmp.eq.s32.totalorder %s18, 1
      %p78 = scmp.ne.s32.totalorder %s73, %s75
      %p79 = scmp.eq.s32.totalorder %s18, 0
      %p80 = por %p78, %p79
      %p81 = scmp.ne.s32.totalorder %s73, %s75
      %p82 = scmp.eq.s32.totalorder %s23, 1
      %p83 = por %p81, %p82
      %p84 = scmp.ne.s32.totalorder %s75, %s76
      %p85 = scmp.eq.s32.totalorder %s23, 0
      %p86 = por %p84, %p85
      %p87 = scmp.ne.s32.totalorder %s75, %s76
      %p88 = scmp.eq.s32.totalorder %s24, 1
      %p89 = por %p87, %p88
      %p91 = scmp.ne.s32.totalorder %s76, %s90
      %p92 = scmp.eq.s32.totalorder %s24, 0
      %p93 = por %p91, %p92
      %s95 = sadd.s32 %s94, 1
      %p98 = scmp.eq.s32.totalorder %s18, 1
      %p99 = scmp.ne.s32.totalorder %s94, %s96
      %p100 = scmp.eq.s32.totalorder %s18, 0
      %p101 = por %p99, %p100
      %p102 = scmp.ne.s32.totalorder %s94, %s96
      %p103 = scmp.eq.s32.totalorder %s23, 1
      %p104 = por %p102, %p103
      %p105 = scmp.ne.s32.totalorder %s96, %s97
      %p106 = scmp.eq.s32.totalorder %s23, 0
      %p107 = por %p105, %p106
      %p108 = scmp.ne.s32.totalorder %s96, %s97
      %p109 = scmp.eq.s32.totalorder %s24, 1
      %p110 = por %p108, %p109
      %p112 = scmp.ne.s32.totalorder %s97, %s111
      %p113 = scmp.eq.s32.totalorder %s24, 0
      %p114 = por %p112, %p113
      %s116 = sadd.s32 %s115, 1
      %p119 = scmp.eq.s32.totalorder %s18, 1
      %p120 = scmp.ne.s32.totalorder %s115, %s117
      %p121 = scmp.eq.s32.totalorder %s18, 0
      %p122 = por %p120, %p121
      %p123 = scmp.ne.s32.totalorder %s115, %s117
      %p124 = scmp.eq.s32.totalorder %s23, 1
      %p125 = por %p123, %p124
      %p126 = scmp.ne.s32.totalorder %s117, %s118
      %p127 = scmp.eq.s32.totalorder %s23, 0
      %p128 = por %p126, %p127
      %p129 = scmp.ne.s32.totalorder %s117, %s118
      %p130 = scmp.eq.s32.totalorder %s24, 1
      %p131 = por %p129, %p130
      %p133 = scmp.ne.s32.totalorder %s118, %s132
      %p134 = scmp.eq.s32.totalorder %s24, 0
      %p135 = por %p133, %p134
      %s137 = sadd.s32 %s136, 1
      %p140 = scmp.eq.s32.totalorder %s18, 1
      %p141 = scmp.ne.s32.totalorder %s136, %s138
      %p142 = scmp.eq.s32.totalorder %s18, 0
      %p143 = por %p141, %p142
      %p144 = scmp.ne.s32.totalorder %s136, %s138
      %p145 = scmp.eq.s32.totalorder %s23, 1
      %p146 = por %p144, %p145
      %p147 = scmp.ne.s32.totalorder %s138, %s139
      %p148 = scmp.eq.s32.totalorder %s23, 0
      %p149 = por %p147, %p148
      %p150 = scmp.ne.s32.totalorder %s138, %s139
      %p151 = scmp.eq.s32.totalorder %s24, 1
      %p152 = por %p150, %p151
      %p154 = scmp.ne.s32.totalorder %s139, %s153
      %p155 = scmp.eq.s32.totalorder %s24, 0
      %p156 = por %p154, %p155
      %s158 = sadd.s32 %s157, 1
      %p161 = scmp.eq.s32.totalorder %s18, 1
      %p162 = scmp.ne.s32.totalorder %s157, %s159
      %p163 = scmp.eq.s32.totalorder %s18, 0
      %p164 = por %p162, %p163
      %p165 = scmp.ne.s32.totalorder %s157, %s159
      %p166 = scmp.eq.s32.totalorder %s23, 1
      %p167 = por %p165, %p166
      %p168 = scmp.ne.s32.totalorder %s159, %s160
      %p169 = scmp.eq.s32.totalorder %s23, 0
      %p170 = por %p168, %p169
      %p171 = scmp.ne.s32.totalorder %s159, %s160
      %p172 = scmp.eq.s32.totalorder %s24, 1
      %p173 = por %p171, %p172
      %p175 = scmp.ne.s32.totalorder %s160, %s174
      %p176 = scmp.eq.s32.totalorder %s24, 0
      %p177 = por %p175, %p176
      %s178 = ssub.s32 %s18, %s25
      %p179 = scmp.eq.s32.totalorder %s178, 0
      %s181 = sadd.s32 %s180, 1
      %s182 = scalar_select %p179, %s180, %s181
      %p185 = pneg %p179
      %p186 = scmp.eq.s32.totalorder %s18, 1
      %p187 = por %p185, %p186
      %p188 = scmp.ne.s32.totalorder %s180, %s183
      %p189 = scmp.eq.s32.totalorder %s18, 0
      %p190 = por %p188, %p189
      %p191 = scmp.ne.s32.totalorder %s180, %s183
      %p192 = scmp.eq.s32.totalorder %s23, 1
      %p193 = por %p191, %p192
      %p194 = scmp.ne.s32.totalorder %s183, %s184
      %p195 = scmp.eq.s32.totalorder %s23, 0
      %p196 = por %p194, %p195
      %p197 = scmp.ne.s32.totalorder %s183, %s184
      %p198 = scmp.eq.s32.totalorder %s24, 1
      %p199 = por %p197, %p198
      %p201 = scmp.ne.s32.totalorder %s184, %s200
      %p202 = scmp.eq.s32.totalorder %s24, 0
      %p203 = por %p201, %p202
      %p204 = scmp.le.s32.totalorder 1, %s18
      %p205 = scmp.lt.s32.totalorder %s18, 3
      %p206 = pnand %p204, %p205
      %p207 = pneg %p206
      // Predicated region
      $region9: #{deepfm_forward.1} parent=5 // pred_check
        _
      $region10: #{deepfm_forward.1} parent=5 // pred_check_branch
        %209 = sbr.rel (%p206) target = $region12
      $region11: #{deepfm_forward.1} parent=5 // pred_region
        %s210 = ssub.s32 %s18, 1
        // Predicated region
        $region13: #{deepfm_forward.1} parent=11 // pred_check
          %p211 = pneg %p65
        $region14: #{deepfm_forward.1} parent=11 // pred_check_branch
          %213 = sbr.rel (%p211) target = $region16
        $region15: #{deepfm_forward.1} parent=11 // pred_region
          _
        $region16: #{deepfm_forward.1} parent=11 // pred_fallthru
          _
        // Predicated region
        $region17: #{deepfm_forward.1} parent=11 // pred_check
          %p214 = pneg %p86
        $region18: #{deepfm_forward.1} parent=11 // pred_check_branch
          %216 = sbr.rel (%p214) target = $region20
        $region19: #{deepfm_forward.1} parent=11 // pred_region
          _
        $region20: #{deepfm_forward.1} parent=11 // pred_fallthru
          _
        // Predicated region
        $region21: #{deepfm_forward.1} parent=11 // pred_check
          %p217 = pneg %p107
        $region22: #{deepfm_forward.1} parent=11 // pred_check_branch
          %219 = sbr.rel (%p217) target = $region24
        $region23: #{deepfm_forward.1} parent=11 // pred_region
          _
        $region24: #{deepfm_forward.1} parent=11 // pred_fallthru
          _
        // Predicated region
        $region25: #{deepfm_forward.1} parent=11 // pred_check
          %p220 = pneg %p128
        $region26: #{deepfm_forward.1} parent=11 // pred_check_branch
          %222 = sbr.rel (%p220) target = $region28
        $region27: #{deepfm_forward.1} parent=11 // pred_region
          _
        $region28: #{deepfm_forward.1} parent=11 // pred_fallthru
          _
        // Predicated region
        $region29: #{deepfm_forward.1} parent=11 // pred_check
          %p223 = pneg %p149
        $region30: #{deepfm_forward.1} parent=11 // pred_check_branch
          %225 = sbr.rel (%p223) target = $region32
        $region31: #{deepfm_forward.1} parent=11 // pred_region
          _
        $region32: #{deepfm_forward.1} parent=11 // pred_fallthru
          _
        // Predicated region
        $region33: #{deepfm_forward.1} parent=11 // pred_check
          %p226 = pneg %p170
        $region34: #{deepfm_forward.1} parent=11 // pred_check_branch
          %228 = sbr.rel (%p226) target = $region36
        $region35: #{deepfm_forward.1} parent=11 // pred_region
          _
        $region36: #{deepfm_forward.1} parent=11 // pred_fallthru
          _
      $region12: #{deepfm_forward.1} parent=5 // pred_fallthru
        _
      %p229 = scmp.lt.s32.totalorder %s18, 2
      // Predicated region
      $region37: #{deepfm_forward.1} parent=5 // pred_check
        %p230 = pneg %p229
      $region38: #{deepfm_forward.1} parent=5 // pred_check_branch
        %232 = sbr.rel (%p230) target = $region40
      $region39: #{deepfm_forward.1} parent=5 // pred_region
        // Predicated region
        $region41: #{deepfm_forward.1} parent=39 // pred_check
          %p233 = pneg %p38
        $region42: #{deepfm_forward.1} parent=39 // pred_check_branch
          %235 = sbr.rel (%p233) target = $region44
        $region43: #{deepfm_forward.1} parent=39 // pred_region
          %s236 = smul.u32 2, %s18
          %p237 = scmp.lt.s32.totalorder %s236, 3
          %s238 = scalar_select %p237, %s236, 3
          %s239 = smul.addr %s238, 4
          %s240 = scalar_lea.vmem %s0, %s239
          %s241 = smul.u32 2, %s18
        $region44: #{deepfm_forward.1} parent=39 // pred_fallthru
          _
      $region40: #{deepfm_forward.1} parent=5 // pred_fallthru
        _
      %p242 = scmp.le.s32.totalorder 1, %s18
      %p243 = scmp.lt.s32.totalorder %s18, 3
      %p244 = pnand %p242, %p243
      %p245 = pneg %p244
      // Predicated region
      $region45: #{deepfm_forward.1} parent=5 // pred_check
        _
      $region46: #{deepfm_forward.1} parent=5 // pred_check_branch
        %247 = sbr.rel (%p244) target = $region48
      $region47: #{deepfm_forward.1} parent=5 // pred_region
        %s248 = ssub.s32 %s18, 1
        %s249 = smul.u32 2, %s23
        %p250 = scmp.lt.s32.totalorder %s249, 3
        %s251 = scalar_select %p250, %s249, 3
        %s252 = smul.addr %s251, 4
        %s253 = scalar_lea.vmem %s0, %s252
        %p254 = pneg %p44
        %p255 = pneg %p41
        %p256 = pneg %p65
        %p257 = pneg %p62
        %p258 = pneg %p86
        %p259 = pneg %p83
        %p260 = pneg %p107
        %p261 = pneg %p104
        %p262 = pneg %p128
        %p263 = pneg %p125
        %p264 = pneg %p149
        %p265 = pneg %p146
        %p266 = pneg %p170
        %p267 = pneg %p167
        %p268 = pneg %p196
        %p269 = pneg %p193
        %s270 = sand.u32 %s183, 1
        %s271 = scalar_lea.sflag [#allocation4], %s270
        %s272 = sand.u32 %s183, 1
        %s273 = smul.addr %s272, 2
        %s274 = scalar_lea.vmem [#allocation3], %s273
        %s275 = smul.u32 2, %s23
        %p276 = scmp.lt.s32.totalorder %s275, 3
        %s277 = scalar_select %p276, %s275, 3
        %s278 = smul.addr %s277, 4
        %s279 = scalar_lea.vmem %s0, %s278
        %s280 = smul.u32 2, %s23
        %s281 = smul.u32 2, %s23
        %v282 = vlaneseq
        %v283 = vshrl.u32 %v282, 7
        %v284 = vadd.s32 %v283, 8
        %v285 = vadd.s32 %v283, 16
        %v286 = vadd.s32 %v283, 24
        %v287 = vadd.s32 %v283, 32
        %v288 = vadd.s32 %v283, 40
        %v289 = vadd.s32 %v283, 48
        %v290 = vadd.s32 %v283, 56
        %v291 = vadd.s32 %v283, 64
        %v292 = vadd.s32 %v283, 72
        %v293 = vadd.s32 %v283, 80
        %v294 = vadd.s32 %v283, 88
        %v295 = vadd.s32 %v283, 96
        %v296 = vadd.s32 %v283, 104
        %v297 = vadd.s32 %v283, 112
        %v298 = vadd.s32 %v283, 120
        %v299 = vld [vmem:[%s279] ss:$4 sm:$0x3]
        %v300 = vperm.slane %v299, 0
        %v301 = vperm.slane %v299, 1
        %vm302 = vcmp.eq.s32.totalorder %v283, %v300
        %vm303 = vcmp.eq.s32.totalorder %v283, %v301
        %vm304 = vcmp.eq.s32.totalorder %v284, %v300
        %vm305 = vcmp.eq.s32.totalorder %v284, %v301
        %vm306 = vcmp.eq.s32.totalorder %v285, %v300
        %vm307 = vcmp.eq.s32.totalorder %v285, %v301
        %vm308 = vcmp.eq.s32.totalorder %v286, %v300
        %vm309 = vcmp.eq.s32.totalorder %v286, %v301
        %vm310 = vcmp.eq.s32.totalorder %v287, %v300
        %vm311 = vcmp.eq.s32.totalorder %v287, %v301
        %vm312 = vcmp.eq.s32.totalorder %v288, %v300
        %vm313 = vcmp.eq.s32.totalorder %v288, %v301
        %vm314 = vcmp.eq.s32.totalorder %v289, %v300
        %vm315 = vcmp.eq.s32.totalorder %v289, %v301
        %vm316 = vcmp.eq.s32.totalorder %v290, %v300
        %vm317 = vcmp.eq.s32.totalorder %v290, %v301
        %vm318 = vcmp.eq.s32.totalorder %v291, %v300
        %vm319 = vcmp.eq.s32.totalorder %v291, %v301
        %vm320 = vcmp.eq.s32.totalorder %v292, %v300
        %vm321 = vcmp.eq.s32.totalorder %v292, %v301
        %vm322 = vcmp.eq.s32.totalorder %v293, %v300
        %vm323 = vcmp.eq.s32.totalorder %v293, %v301
        %vm324 = vcmp.eq.s32.totalorder %v294, %v300
        %vm325 = vcmp.eq.s32.totalorder %v294, %v301
        %vm326 = vcmp.eq.s32.totalorder %v295, %v300
        %vm327 = vcmp.eq.s32.totalorder %v295, %v301
        %vm328 = vcmp.eq.s32.totalorder %v296, %v300
        %vm329 = vcmp.eq.s32.totalorder %v296, %v301
        %vm330 = vcmp.eq.s32.totalorder %v297, %v300
        %vm331 = vcmp.eq.s32.totalorder %v297, %v301
        %vm332 = vcmp.eq.s32.totalorder %v298, %v300
        %vm333 = vcmp.eq.s32.totalorder %v298, %v301
        %v334 = vsel %vm302, 1.0, 0.0
        %v335 = vsel %vm303, 1.0, 0.0
        %v336 = vsel %vm304, 1.0, 0.0
        %v337 = vsel %vm305, 1.0, 0.0
        %v338 = vsel %vm306, 1.0, 0.0
        %v339 = vsel %vm307, 1.0, 0.0
        %v340 = vsel %vm308, 1.0, 0.0
        %v341 = vsel %vm309, 1.0, 0.0
        %v342 = vsel %vm310, 1.0, 0.0
        %v343 = vsel %vm311, 1.0, 0.0
        %v344 = vsel %vm312, 1.0, 0.0
        %v345 = vsel %vm313, 1.0, 0.0
        %v346 = vsel %vm314, 1.0, 0.0
        %v347 = vsel %vm315, 1.0, 0.0
        %v348 = vsel %vm316, 1.0, 0.0
        %v349 = vsel %vm317, 1.0, 0.0
        %v350 = vsel %vm318, 1.0, 0.0
        %v351 = vsel %vm319, 1.0, 0.0
        %v352 = vsel %vm320, 1.0, 0.0
        %v353 = vsel %vm321, 1.0, 0.0
        %v354 = vsel %vm322, 1.0, 0.0
        %v355 = vsel %vm323, 1.0, 0.0
        %v356 = vsel %vm324, 1.0, 0.0
        %v357 = vsel %vm325, 1.0, 0.0
        %v358 = vsel %vm326, 1.0, 0.0
        %v359 = vsel %vm327, 1.0, 0.0
        %v360 = vsel %vm328, 1.0, 0.0
        %v361 = vsel %vm329, 1.0, 0.0
        %v362 = vsel %vm330, 1.0, 0.0
        %v363 = vsel %vm331, 1.0, 0.0
        %v364 = vsel %vm332, 1.0, 0.0
        %v365 = vsel %vm333, 1.0, 0.0
        %v366 = vadd.f32 %v334, 0.0
        %v367 = vadd.f32 %v335, 0.0
        %v368 = vadd.f32 %v336, 0.0
        %v369 = vadd.f32 %v337, 0.0
        %v370 = vadd.f32 %v338, 0.0
        %v371 = vadd.f32 %v339, 0.0
        %v372 = vadd.f32 %v340, 0.0
        %v373 = vadd.f32 %v341, 0.0
        %v374 = vadd.f32 %v342, 0.0
        %v375 = vadd.f32 %v343, 0.0
        %v376 = vadd.f32 %v344, 0.0
        %v377 = vadd.f32 %v345, 0.0
        %v378 = vadd.f32 %v346, 0.0
        %v379 = vadd.f32 %v347, 0.0
        %v380 = vadd.f32 %v348, 0.0
        %v381 = vadd.f32 %v349, 0.0
        %v382 = vadd.f32 %v350, 0.0
        %v383 = vadd.f32 %v351, 0.0
        %v384 = vadd.f32 %v352, 0.0
        %v385 = vadd.f32 %v353, 0.0
        %v386 = vadd.f32 %v354, 0.0
        %v387 = vadd.f32 %v355, 0.0
        %v388 = vadd.f32 %v356, 0.0
        %v389 = vadd.f32 %v357, 0.0
        %v390 = vadd.f32 %v358, 0.0
        %v391 = vadd.f32 %v359, 0.0
        %v392 = vadd.f32 %v360, 0.0
        %v393 = vadd.f32 %v361, 0.0
        %v394 = vadd.f32 %v362, 0.0
        %v395 = vadd.f32 %v363, 0.0
        %v396 = vadd.f32 %v364, 0.0
        %v397 = vadd.f32 %v365, 0.0
        %s398 = scalar_lea.vmem %s279, 1
        %v399 = vld [vmem:[%s398] ss:$4 sm:$0x3]
        %v400 = vperm.slane %v399, 0
        %v401 = vperm.slane %v399, 1
        %vm402 = vcmp.eq.s32.totalorder %v283, %v400
        %vm403 = vcmp.eq.s32.totalorder %v283, %v401
        %vm404 = vcmp.eq.s32.totalorder %v284, %v400
        %vm405 = vcmp.eq.s32.totalorder %v284, %v401
        %vm406 = vcmp.eq.s32.totalorder %v285, %v400
        %vm407 = vcmp.eq.s32.totalorder %v285, %v401
        %vm408 = vcmp.eq.s32.totalorder %v286, %v400
        %vm409 = vcmp.eq.s32.totalorder %v286, %v401
        %vm410 = vcmp.eq.s32.totalorder %v287, %v400
        %vm411 = vcmp.eq.s32.totalorder %v287, %v401
        %vm412 = vcmp.eq.s32.totalorder %v288, %v400
        %vm413 = vcmp.eq.s32.totalorder %v288, %v401
        %vm414 = vcmp.eq.s32.totalorder %v289, %v400
        %vm415 = vcmp.eq.s32.totalorder %v289, %v401
        %vm416 = vcmp.eq.s32.totalorder %v290, %v400
        %vm417 = vcmp.eq.s32.totalorder %v290, %v401
        %vm418 = vcmp.eq.s32.totalorder %v291, %v400
        %vm419 = vcmp.eq.s32.totalorder %v291, %v401
        %vm420 = vcmp.eq.s32.totalorder %v292, %v400
        %vm421 = vcmp.eq.s32.totalorder %v292, %v401
        %vm422 = vcmp.eq.s32.totalorder %v293, %v400
        %vm423 = vcmp.eq.s32.totalorder %v293, %v401
        %vm424 = vcmp.eq.s32.totalorder %v294, %v400
        %vm425 = vcmp.eq.s32.totalorder %v294, %v401
        %vm426 = vcmp.eq.s32.totalorder %v295, %v400
        %vm427 = vcmp.eq.s32.totalorder %v295, %v401
        %vm428 = vcmp.eq.s32.totalorder %v296, %v400
        %vm429 = vcmp.eq.s32.totalorder %v296, %v401
        %vm430 = vcmp.eq.s32.totalorder %v297, %v400
        %vm431 = vcmp.eq.s32.totalorder %v297, %v401
        %vm432 = vcmp.eq.s32.totalorder %v298, %v400
        %vm433 = vcmp.eq.s32.totalorder %v298, %v401
        %v434 = vsel %vm402, 1.0, 0.0
        %v435 = vsel %vm403, 1.0, 0.0
        %v436 = vsel %vm404, 1.0, 0.0
        %v437 = vsel %vm405, 1.0, 0.0
        %v438 = vsel %vm406, 1.0, 0.0
        %v439 = vsel %vm407, 1.0, 0.0
        %v440 = vsel %vm408, 1.0, 0.0
        %v441 = vsel %vm409, 1.0, 0.0
        %v442 = vsel %vm410, 1.0, 0.0
        %v443 = vsel %vm411, 1.0, 0.0
        %v444 = vsel %vm412, 1.0, 0.0
        %v445 = vsel %vm413, 1.0, 0.0
        %v446 = vsel %vm414, 1.0, 0.0
        %v447 = vsel %vm415, 1.0, 0.0
        %v448 = vsel %vm416, 1.0, 0.0
        %v449 = vsel %vm417, 1.0, 0.0
        %v450 = vsel %vm418, 1.0, 0.0
        %v451 = vsel %vm419, 1.0, 0.0
        %v452 = vsel %vm420, 1.0, 0.0
        %v453 = vsel %vm421, 1.0, 0.0
        %v454 = vsel %vm422, 1.0, 0.0
        %v455 = vsel %vm423, 1.0, 0.0
        %v456 = vsel %vm424, 1.0, 0.0
        %v457 = vsel %vm425, 1.0, 0.0
        %v458 = vsel %vm426, 1.0, 0.0
        %v459 = vsel %vm427, 1.0, 0.0
        %v460 = vsel %vm428, 1.0, 0.0
        %v461 = vsel %vm429, 1.0, 0.0
        %v462 = vsel %vm430, 1.0, 0.0
        %v463 = vsel %vm431, 1.0, 0.0
        %v464 = vsel %vm432, 1.0, 0.0
        %v465 = vsel %vm433, 1.0, 0.0
        %v466 = vadd.f32 %v366, %v434
        %v467 = vadd.f32 %v367, %v435
        %v468 = vadd.f32 %v368, %v436
        %v469 = vadd.f32 %v369, %v437
        %v470 = vadd.f32 %v370, %v438
        %v471 = vadd.f32 %v371, %v439
        %v472 = vadd.f32 %v372, %v440
        %v473 = vadd.f32 %v373, %v441
        %v474 = vadd.f32 %v374, %v442
        %v475 = vadd.f32 %v375, %v443
        %v476 = vadd.f32 %v376, %v444
        %v477 = vadd.f32 %v377, %v445
        %v478 = vadd.f32 %v378, %v446
        %v479 = vadd.f32 %v379, %v447
        %v480 = vadd.f32 %v380, %v448
        %v481 = vadd.f32 %v381, %v449
        %v482 = vadd.f32 %v382, %v450
        %v483 = vadd.f32 %v383, %v451
        %v484 = vadd.f32 %v384, %v452
        %v485 = vadd.f32 %v385, %v453
        %v486 = vadd.f32 %v386, %v454
        %v487 = vadd.f32 %v387, %v455
        %v488 = vadd.f32 %v388, %v456
        %v489 = vadd.f32 %v389, %v457
        %v490 = vadd.f32 %v390, %v458
        %v491 = vadd.f32 %v391, %v459
        %v492 = vadd.f32 %v392, %v460
        %v493 = vadd.f32 %v393, %v461
        %v494 = vadd.f32 %v394, %v462
        %v495 = vadd.f32 %v395, %v463
        %v496 = vadd.f32 %v396, %v464
        %v497 = vadd.f32 %v397, %v465
        %s498 = scalar_lea.vmem %s279, 2
        %v499 = vld [vmem:[%s498] ss:$4 sm:$0x3]
        %v500 = vperm.slane %v499, 0
        %v501 = vperm.slane %v499, 1
        %vm502 = vcmp.eq.s32.totalorder %v283, %v500
        %vm503 = vcmp.eq.s32.totalorder %v283, %v501
        %vm504 = vcmp.eq.s32.totalorder %v284, %v500
        %vm505 = vcmp.eq.s32.totalorder %v284, %v501
        %vm506 = vcmp.eq.s32.totalorder %v285, %v500
        %vm507 = vcmp.eq.s32.totalorder %v285, %v501
        %vm508 = vcmp.eq.s32.totalorder %v286, %v500
        %vm509 = vcmp.eq.s32.totalorder %v286, %v501
        %vm510 = vcmp.eq.s32.totalorder %v287, %v500
        %vm511 = vcmp.eq.s32.totalorder %v287, %v501
        %vm512 = vcmp.eq.s32.totalorder %v288, %v500
        %vm513 = vcmp.eq.s32.totalorder %v288, %v501
        %vm514 = vcmp.eq.s32.totalorder %v289, %v500
        %vm515 = vcmp.eq.s32.totalorder %v289, %v501
        %vm516 = vcmp.eq.s32.totalorder %v290, %v500
        %vm517 = vcmp.eq.s32.totalorder %v290, %v501
        %vm518 = vcmp.eq.s32.totalorder %v291, %v500
        %vm519 = vcmp.eq.s32.totalorder %v291, %v501
        %vm520 = vcmp.eq.s32.totalorder %v292, %v500
        %vm521 = vcmp.eq.s32.totalorder %v292, %v501
        %vm522 = vcmp.eq.s32.totalorder %v293, %v500
        %vm523 = vcmp.eq.s32.totalorder %v293, %v501
        %vm524 = vcmp.eq.s32.totalorder %v294, %v500
        %vm525 = vcmp.eq.s32.totalorder %v294, %v501
        %vm526 = vcmp.eq.s32.totalorder %v295, %v500
        %vm527 = vcmp.eq.s32.totalorder %v295, %v501
        %vm528 = vcmp.eq.s32.totalorder %v296, %v500
        %vm529 = vcmp.eq.s32.totalorder %v296, %v501
        %vm530 = vcmp.eq.s32.totalorder %v297, %v500
        %vm531 = vcmp.eq.s32.totalorder %v297, %v501
        %vm532 = vcmp.eq.s32.totalorder %v298, %v500
        %vm533 = vcmp.eq.s32.totalorder %v298, %v501
        %v534 = vsel %vm502, 1.0, 0.0
        %v535 = vsel %vm503, 1.0, 0.0
        %v536 = vsel %vm504, 1.0, 0.0
        %v537 = vsel %vm505, 1.0, 0.0
        %v538 = vsel %vm506, 1.0, 0.0
        %v539 = vsel %vm507, 1.0, 0.0
        %v540 = vsel %vm508, 1.0, 0.0
        %v541 = vsel %vm509, 1.0, 0.0
        %v542 = vsel %vm510, 1.0, 0.0
        %v543 = vsel %vm511, 1.0, 0.0
        %v544 = vsel %vm512, 1.0, 0.0
        %v545 = vsel %vm513, 1.0, 0.0
        %v546 = vsel %vm514, 1.0, 0.0
        %v547 = vsel %vm515, 1.0, 0.0
        %v548 = vsel %vm516, 1.0, 0.0
        %v549 = vsel %vm517, 1.0, 0.0
        %v550 = vsel %vm518, 1.0, 0.0
        %v551 = vsel %vm519, 1.0, 0.0
        %v552 = vsel %vm520, 1.0, 0.0
        %v553 = vsel %vm521, 1.0, 0.0
        %v554 = vsel %vm522, 1.0, 0.0
        %v555 = vsel %vm523, 1.0, 0.0
        %v556 = vsel %vm524, 1.0, 0.0
        %v557 = vsel %vm525, 1.0, 0.0
        %v558 = vsel %vm526, 1.0, 0.0
        %v559 = vsel %vm527, 1.0, 0.0
        %v560 = vsel %vm528, 1.0, 0.0
        %v561 = vsel %vm529, 1.0, 0.0
        %v562 = vsel %vm530, 1.0, 0.0
        %v563 = vsel %vm531, 1.0, 0.0
        %v564 = vsel %vm532, 1.0, 0.0
        %v565 = vsel %vm533, 1.0, 0.0
        %v566 = vadd.f32 %v466, %v534
        %v567 = vadd.f32 %v467, %v535
        %v568 = vadd.f32 %v468, %v536
        %v569 = vadd.f32 %v469, %v537
        %v570 = vadd.f32 %v470, %v538
        %v571 = vadd.f32 %v471, %v539
        %v572 = vadd.f32 %v472, %v540
        %v573 = vadd.f32 %v473, %v541
        %v574 = vadd.f32 %v474, %v542
        %v575 = vadd.f32 %v475, %v543
        %v576 = vadd.f32 %v476, %v544
        %v577 = vadd.f32 %v477, %v545
        %v578 = vadd.f32 %v478, %v546
        %v579 = vadd.f32 %v479, %v547
        %v580 = vadd.f32 %v480, %v548
        %v581 = vadd.f32 %v481, %v549
        %v582 = vadd.f32 %v482, %v550
        %v583 = vadd.f32 %v483, %v551
        %v584 = vadd.f32 %v484, %v552
        %v585 = vadd.f32 %v485, %v553
        %v586 = vadd.f32 %v486, %v554
        %v587 = vadd.f32 %v487, %v555
        %v588 = vadd.f32 %v488, %v556
        %v589 = vadd.f32 %v489, %v557
        %v590 = vadd.f32 %v490, %v558
        %v591 = vadd.f32 %v491, %v559
        %v592 = vadd.f32 %v492, %v560
        %v593 = vadd.f32 %v493, %v561
        %v594 = vadd.f32 %v494, %v562
        %v595 = vadd.f32 %v495, %v563
        %v596 = vadd.f32 %v496, %v564
        %v597 = vadd.f32 %v497, %v565
        %s598 = scalar_lea.vmem %s279, 3
        %v599 = vld [vmem:[%s598] ss:$4 sm:$0x3]
        %v600 = vperm.slane %v599, 0
        %v601 = vperm.slane %v599, 1
        %vm602 = vcmp.eq.s32.totalorder %v283, %v600
        %vm603 = vcmp.eq.s32.totalorder %v283, %v601
        %vm604 = vcmp.eq.s32.totalorder %v284, %v600
        %vm605 = vcmp.eq.s32.totalorder %v284, %v601
        %vm606 = vcmp.eq.s32.totalorder %v285, %v600
        %vm607 = vcmp.eq.s32.totalorder %v285, %v601
        %vm608 = vcmp.eq.s32.totalorder %v286, %v600
        %vm609 = vcmp.eq.s32.totalorder %v286, %v601
        %vm610 = vcmp.eq.s32.totalorder %v287, %v600
        %vm611 = vcmp.eq.s32.totalorder %v287, %v601
        %vm612 = vcmp.eq.s32.totalorder %v288, %v600
        %vm613 = vcmp.eq.s32.totalorder %v288, %v601
        %vm614 = vcmp.eq.s32.totalorder %v289, %v600
        %vm615 = vcmp.eq.s32.totalorder %v289, %v601
        %vm616 = vcmp.eq.s32.totalorder %v290, %v600
        %vm617 = vcmp.eq.s32.totalorder %v290, %v601
        %vm618 = vcmp.eq.s32.totalorder %v291, %v600
        %vm619 = vcmp.eq.s32.totalorder %v291, %v601
        %vm620 = vcmp.eq.s32.totalorder %v292, %v600
        %vm621 = vcmp.eq.s32.totalorder %v292, %v601
        %vm622 = vcmp.eq.s32.totalorder %v293, %v600
        %vm623 = vcmp.eq.s32.totalorder %v293, %v601
        %vm624 = vcmp.eq.s32.totalorder %v294, %v600
        %vm625 = vcmp.eq.s32.totalorder %v294, %v601
        %vm626 = vcmp.eq.s32.totalorder %v295, %v600
        %vm627 = vcmp.eq.s32.totalorder %v295, %v601
        %vm628 = vcmp.eq.s32.totalorder %v296, %v600
        %vm629 = vcmp.eq.s32.totalorder %v296, %v601
        %vm630 = vcmp.eq.s32.totalorder %v297, %v600
        %vm631 = vcmp.eq.s32.totalorder %v297, %v601
        %vm632 = vcmp.eq.s32.totalorder %v298, %v600
        %vm633 = vcmp.eq.s32.totalorder %v298, %v601
        %v634 = vsel %vm602, 1.0, 0.0
        %v635 = vsel %vm603, 1.0, 0.0
        %v636 = vsel %vm604, 1.0, 0.0
        %v637 = vsel %vm605, 1.0, 0.0
        %v638 = vsel %vm606, 1.0, 0.0
        %v639 = vsel %vm607, 1.0, 0.0
        %v640 = vsel %vm608, 1.0, 0.0
        %v641 = vsel %vm609, 1.0, 0.0
        %v642 = vsel %vm610, 1.0, 0.0
        %v643 = vsel %vm611, 1.0, 0.0
        %v644 = vsel %vm612, 1.0, 0.0
        %v645 = vsel %vm613, 1.0, 0.0
        %v646 = vsel %vm614, 1.0, 0.0
        %v647 = vsel %vm615, 1.0, 0.0
        %v648 = vsel %vm616, 1.0, 0.0
        %v649 = vsel %vm617, 1.0, 0.0
        %v650 = vsel %vm618, 1.0, 0.0
        %v651 = vsel %vm619, 1.0, 0.0
        %v652 = vsel %vm620, 1.0, 0.0
        %v653 = vsel %vm621, 1.0, 0.0
        %v654 = vsel %vm622, 1.0, 0.0
        %v655 = vsel %vm623, 1.0, 0.0
        %v656 = vsel %vm624, 1.0, 0.0
        %v657 = vsel %vm625, 1.0, 0.0
        %v658 = vsel %vm626, 1.0, 0.0
        %v659 = vsel %vm627, 1.0, 0.0
        %v660 = vsel %vm628, 1.0, 0.0
        %v661 = vsel %vm629, 1.0, 0.0
        %v662 = vsel %vm630, 1.0, 0.0
        %v663 = vsel %vm631, 1.0, 0.0
        %v664 = vsel %vm632, 1.0, 0.0
        %v665 = vsel %vm633, 1.0, 0.0
        %v666 = vadd.f32 %v566, %v634
        %v667 = vadd.f32 %v567, %v635
        %v668 = vadd.f32 %v568, %v636
        %v669 = vadd.f32 %v569, %v637
        %v670 = vadd.f32 %v570, %v638
        %v671 = vadd.f32 %v571, %v639
        %v672 = vadd.f32 %v572, %v640
        %v673 = vadd.f32 %v573, %v641
        %v674 = vadd.f32 %v574, %v642
        %v675 = vadd.f32 %v575, %v643
        %v676 = vadd.f32 %v576, %v644
        %v677 = vadd.f32 %v577, %v645
        %v678 = vadd.f32 %v578, %v646
        %v679 = vadd.f32 %v579, %v647
        %v680 = vadd.f32 %v580, %v648
        %v681 = vadd.f32 %v581, %v649
        %v682 = vadd.f32 %v582, %v650
        %v683 = vadd.f32 %v583, %v651
        %v684 = vadd.f32 %v584, %v652
        %v685 = vadd.f32 %v585, %v653
        %v686 = vadd.f32 %v586, %v654
        %v687 = vadd.f32 %v587, %v655
        %v688 = vadd.f32 %v588, %v656
        %v689 = vadd.f32 %v589, %v657
        %v690 = vadd.f32 %v590, %v658
        %v691 = vadd.f32 %v591, %v659
        %v692 = vadd.f32 %v592, %v660
        %v693 = vadd.f32 %v593, %v661
        %v694 = vadd.f32 %v594, %v662
        %v695 = vadd.f32 %v595, %v663
        %v696 = vadd.f32 %v596, %v664
        %v697 = vadd.f32 %v597, %v665
        %v698 = vld [vmem:[%s1] sm:$0xff]
        %v699 = vld [vmem:[%s1 + $0x8] sm:$0xff]
        %v700 = vld [vmem:[%s1 + $0x10] sm:$0xff]
        %v701 = vld [vmem:[%s1 + $0x18] sm:$0xff]
        %v702 = vld [vmem:[%s1 + $0x20] sm:$0xff]
        %v703 = vld [vmem:[%s1 + $0x28] sm:$0xff]
        %v704 = vld [vmem:[%s1 + $0x30] sm:$0xff]
        %v705 = vld [vmem:[%s1 + $0x38] sm:$0xff]
        %v706 = vld [vmem:[%s1 + $0x40] sm:$0xff]
        %707 = vmatpush.msra.mxu0 %v696
        %708 = vmatpush.msra.mxu0 %v694
        %709 = vmatpush.msra.mxu0 %v692
        %710 = vmatpush.msra.mxu0 %v690
        %711 = vmatpush.msra.mxu0 %v688
        %712 = vmatpush.msra.mxu0 %v686
        %713 = vmatpush.msra.mxu0 %v684
        %714 = vmatpush.msra.mxu0 %v682
        %715 = vmatpush.msra.mxu0 %v680
        %716 = vmatpush.msra.mxu0 %v678
        %717 = vmatpush.msra.mxu0 %v676
        %718 = vmatpush.msra.mxu0 %v674
        %719 = vmatpush.msra.mxu0 %v672
        %720 = vmatpush.msra.mxu0 %v670
        %721 = vmatpush.msra.mxu0 %v668
        %722 = vmatpush.msra.mxu0 %v666
        %723 = vmatmul.f32.gmra.mxu0 %v698
        %v724 = vpop.f32.mrf.mxu0
        %v725 = vadd.f32 0.0, %v724
        %726 = vmatmul.f32.gmra.mxu0 %v699
        %v727 = vpop.f32.mrf.mxu0
        %v728 = vadd.f32 0.0, %v727
        %729 = vmatmul.f32.gmra.mxu0 %v700
        %v730 = vpop.f32.mrf.mxu0
        %v731 = vadd.f32 0.0, %v730
        %732 = vmatmul.f32.gmra.mxu0 %v701
        %v733 = vpop.f32.mrf.mxu0
        %v734 = vadd.f32 0.0, %v733
        %735 = vmatmul.f32.gmra.mxu0 %v702
        %v736 = vpop.f32.mrf.mxu0
        %v737 = vadd.f32 0.0, %v736
        %738 = vmatmul.f32.gmra.mxu0 %v703
        %v739 = vpop.f32.mrf.mxu0
        %v740 = vadd.f32 0.0, %v739
        %741 = vmatmul.f32.gmra.mxu0 %v704
        %v742 = vpop.f32.mrf.mxu0
        %v743 = vadd.f32 0.0, %v742
        %744 = vmatmul.f32.gmra.mxu0 %v705
        %v745 = vpop.f32.mrf.mxu0
        %v746 = vadd.f32 0.0, %v745
        %747 = vmatmul.f32.gmra.mxu0 %v706
        %v748 = vpop.f32.mrf.mxu0
        %v749 = vadd.f32 0.0, %v748
        %750 = vdwg.mxu0
        %751 = vmatpush.msra.mxu0 %v697
        %752 = vmatpush.msra.mxu0 %v695
        %753 = vmatpush.msra.mxu0 %v693
        %754 = vmatpush.msra.mxu0 %v691
        %755 = vmatpush.msra.mxu0 %v689
        %756 = vmatpush.msra.mxu0 %v687
        %757 = vmatpush.msra.mxu0 %v685
        %758 = vmatpush.msra.mxu0 %v683
        %759 = vmatpush.msra.mxu0 %v681
        %760 = vmatpush.msra.mxu0 %v679
        %761 = vmatpush.msra.mxu0 %v677
        %762 = vmatpush.msra.mxu0 %v675
        %763 = vmatpush.msra.mxu0 %v673
        %764 = vmatpush.msra.mxu0 %v671
        %765 = vmatpush.msra.mxu0 %v669
        %766 = vmatpush.msra.mxu0 %v667
        %767 = vmatmul.f32.gmra.mxu0 %v698
        %v768 = vpop.f32.mrf.mxu0
        %v769 = vadd.f32 0.0, %v768
        %770 = vmatmul.f32.gmra.mxu0 %v699
        %v771 = vpop.f32.mrf.mxu0
        %v772 = vadd.f32 0.0, %v771
        %773 = vmatmul.f32.gmra.mxu0 %v700
        %v774 = vpop.f32.mrf.mxu0
        %v775 = vadd.f32 0.0, %v774
        %776 = vmatmul.f32.gmra.mxu0 %v701
        %v777 = vpop.f32.mrf.mxu0
        %v778 = vadd.f32 0.0, %v777
        %779 = vmatmul.f32.gmra.mxu0 %v702
        %v780 = vpop.f32.mrf.mxu0
        %v781 = vadd.f32 0.0, %v780
        %782 = vmatmul.f32.gmra.mxu0 %v703
        %v783 = vpop.f32.mrf.mxu0
        %v784 = vadd.f32 0.0, %v783
        %785 = vmatmul.f32.gmra.mxu0 %v704
        %v786 = vpop.f32.mrf.mxu0
        %v787 = vadd.f32 0.0, %v786
        %788 = vmatmul.f32.gmra.mxu0 %v705
        %v789 = vpop.f32.mrf.mxu0
        %v790 = vadd.f32 0.0, %v789
        %791 = vmatmul.f32.gmra.mxu0 %v706
        %v792 = vpop.f32.mrf.mxu0
        %v793 = vadd.f32 0.0, %v792
        %794 = vdwg.mxu0
        %v795 = vld [vmem:[%s2] sm:$0xff]
        %v796 = vld [vmem:[%s2 + $0x8] sm:$0xff]
        %v797 = vld [vmem:[%s2 + $0x10] sm:$0xff]
        %v798 = vld [vmem:[%s2 + $0x18] sm:$0xff]
        %800 = vset.pattern.permute.xlu0 0
        %801 = vperm.xlu0 %800, %v795
        %v802 = vpop.permute.xlu0 %801
        %805 = vset.pattern.permute.xlu0 0
        %806 = vperm.xlu0 %805, %v796
        %v807 = vpop.permute.xlu0 %806
        %810 = vset.pattern.permute.xlu0 0
        %811 = vperm.xlu0 %810, %v797
        %v812 = vpop.permute.xlu0 %811
        %815 = vset.pattern.permute.xlu0 0
        %816 = vperm.xlu0 %815, %v798
        %v817 = vpop.permute.xlu0 %816
        %v819 = vadd.f32 %v725, %v802
        %v820 = vadd.f32 %v769, %v802
        %v821 = vadd.f32 %v728, %v807
        %v822 = vadd.f32 %v772, %v807
        %v823 = vadd.f32 %v731, %v812
        %v824 = vadd.f32 %v775, %v812
        %v825 = vadd.f32 %v734, %v817
        %v826 = vadd.f32 %v778, %v817
        %v827 = vmax.f32 %v819, 0.0
        %v828 = vmax.f32 %v820, 0.0
        %v829 = vmax.f32 %v821, 0.0
        %v830 = vmax.f32 %v822, 0.0
        %v831 = vmax.f32 %v823, 0.0
        %v832 = vmax.f32 %v824, 0.0
        %v833 = vmax.f32 %v825, 0.0
        %v834 = vmax.f32 %v826, 0.0
        %v835 = vld [vmem:[%s3] sm:$0xff]
        %v836 = vld [vmem:[%s3 + $0x8] sm:$0xff]
        %v837 = vld [vmem:[%s4] sm:$0xff]
        %v838 = vld [vmem:[%s4 + $0x8] sm:$0xff]
        %840 = vset.pattern.permute.xlu0 0
        %841 = vperm.xlu0 %840, %v837
        %v842 = vpop.permute.xlu0 %841
        %845 = vset.pattern.permute.xlu0 0
        %846 = vperm.xlu0 %845, %v838
        %v847 = vpop.permute.xlu0 %846
        %vm849 = vcmask 261120
        %v851 = vsel %vm849, %v835, 0
        %v854 = vsel %vm849, %v836, 0
        %856 = vmatpush.msra.mxu0 0.0
        %857 = vmatpush.msra.mxu0 0.0
        %858 = vmatpush.msra.mxu0 0.0
        %859 = vmatpush.msra.mxu0 0.0
        %860 = vmatpush.msra.mxu0 0.0
        %861 = vmatpush.msra.mxu0 0.0
        %862 = vmatpush.msra.mxu0 0.0
        %863 = vmatpush.msra.mxu0 0.0
        %864 = vmatpush.msra.mxu0 0.0
        %865 = vmatpush.msra.mxu0 0.0
        %866 = vmatpush.msra.mxu0 0.0
        %867 = vmatpush.msra.mxu0 0.0
        %868 = vmatpush.msra.mxu0 %v833
        %869 = vmatpush.msra.mxu0 %v831
        %870 = vmatpush.msra.mxu0 %v829
        %871 = vmatpush.msra.mxu0 %v827
        %872 = vmatmul.f32.gmra.mxu0 %v851
        %v873 = vpop.f32.mrf.mxu0
        %v874 = vadd.f32 %v842, %v873
        %875 = vmatmul.f32.gmra.mxu0 %v854
        %v876 = vpop.f32.mrf.mxu0
        %v877 = vadd.f32 %v847, %v876
        %878 = vdwg.mxu0
        %879 = vmatpush.msra.mxu0 0.0
        %880 = vmatpush.msra.mxu0 0.0
        %881 = vmatpush.msra.mxu0 0.0
        %882 = vmatpush.msra.mxu0 0.0
        %883 = vmatpush.msra.mxu0 0.0
        %884 = vmatpush.msra.mxu0 0.0
        %885 = vmatpush.msra.mxu0 0.0
        %886 = vmatpush.msra.mxu0 0.0
        %887 = vmatpush.msra.mxu0 0.0
        %888 = vmatpush.msra.mxu0 0.0
        %889 = vmatpush.msra.mxu0 0.0
        %890 = vmatpush.msra.mxu0 0.0
        %891 = vmatpush.msra.mxu0 %v834
        %892 = vmatpush.msra.mxu0 %v832
        %893 = vmatpush.msra.mxu0 %v830
        %894 = vmatpush.msra.mxu0 %v828
        %895 = vmatmul.f32.gmra.mxu0 %v851
        %v896 = vpop.f32.mrf.mxu0
        %v897 = vadd.f32 %v842, %v896
        %898 = vmatmul.f32.gmra.mxu0 %v854
        %v899 = vpop.f32.mrf.mxu0
        %v900 = vadd.f32 %v847, %v899
        %901 = vdwg.mxu0
        %v902 = vmax.f32 %v874, 0.0
        %v903 = vmax.f32 %v897, 0.0
        %v904 = vmax.f32 %v877, 0.0
        %v905 = vmax.f32 %v900, 0.0
        %v906 = vld [vmem:[%s5] sm:$0xff]
        %v907 = vld [vmem:[%s5 + $0x8] sm:$0xff]
        %909 = vset.pattern.permute.xlu0 0
        %910 = vperm.xlu0 %909, %v906
        %v911 = vpop.permute.xlu0 %910
        %914 = vset.pattern.permute.xlu0 0
        %915 = vperm.xlu0 %914, %v907
        %v916 = vpop.permute.xlu0 %915
        %v918 = vmul.f32 %v902, %v911
        %v919 = vmul.f32 %v903, %v911
        %v920 = vmul.f32 %v904, %v916
        %v921 = vmul.f32 %v905, %v916
        %v922 = vadd.f32 %v918, %v920
        %v923 = vrot.slane %v922, 4
        %v924 = vadd.f32 %v922, %v923
        %v925 = vrot.slane %v924, 2
        %v926 = vadd.f32 %v924, %v925
        %v927 = vrot.slane %v926, 1
        %v928 = vadd.f32 %v926, %v927
        %v929 = vadd.f32 %v919, %v921
        %v930 = vrot.slane %v929, 4
        %v931 = vadd.f32 %v929, %v930
        %v932 = vrot.slane %v931, 2
        %v933 = vadd.f32 %v931, %v932
        %v934 = vrot.slane %v933, 1
        %v935 = vadd.f32 %v933, %v934
        %v936 = vmul.f32 %v737, %v737
        %v937 = vmul.f32 %v781, %v781
        %v938 = vmul.f32 %v740, %v740
        %v939 = vmul.f32 %v784, %v784
        %v940 = vadd.f32 %v936, %v938
        %v941 = vrot.slane %v940, 4
        %v942 = vadd.f32 %v940, %v941
        %v943 = vrot.slane %v942, 2
        %v944 = vadd.f32 %v942, %v943
        %v945 = vrot.slane %v944, 1
        %v946 = vadd.f32 %v944, %v945
        %v947 = vadd.f32 %v937, %v939
        %v948 = vrot.slane %v947, 4
        %v949 = vadd.f32 %v947, %v948
        %v950 = vrot.slane %v949, 2
        %v951 = vadd.f32 %v949, %v950
        %v952 = vrot.slane %v951, 1
        %v953 = vadd.f32 %v951, %v952
        %v954 = vadd.f32 %v743, %v746
        %v955 = vrot.slane %v954, 4
        %v956 = vadd.f32 %v954, %v955
        %v957 = vrot.slane %v956, 2
        %v958 = vadd.f32 %v956, %v957
        %v959 = vrot.slane %v958, 1
        %v960 = vadd.f32 %v958, %v959
        %v961 = vadd.f32 %v787, %v790
        %v962 = vrot.slane %v961, 4
        %v963 = vadd.f32 %v961, %v962
        %v964 = vrot.slane %v963, 2
        %v965 = vadd.f32 %v963, %v964
        %v966 = vrot.slane %v965, 1
        %v967 = vadd.f32 %v965, %v966
        %v968 = vsub.f32 %v946, %v960
        %v969 = vsub.f32 %v953, %v967
        %v970 = vmul.f32 %v968, 0.5
        %v971 = vmul.f32 %v969, 0.5
        %v972 = vadd.f32 %v928, %v970
        %v973 = vadd.f32 %v935, %v971
        %v974 = vadd.f32 %v972, %v749
        %v975 = vadd.f32 %v973, %v793
        %v976 = vld [vmem:[#allocation2] sm:$0x1]
        %978 = vset.pattern.permute.xlu0 0
        %979 = vperm.xlu0 %978, %v976
        %v980 = vpop.permute.xlu0 %979
        %v982 = vperm.slane %v980, 0
        %v983 = vadd.f32 %v974, %v982
        %v984 = vadd.f32 %v975, %v982
        %v985 = vxor.u32 %v983, 2147483648
        %v986 = vxor.u32 %v984, 2147483648
        %v987 = vmul.f32 %v985, 1.442695
        %v988 = vpow.pop %v987
        %v989 = vmul.f32 %v986, 1.442695
        %v990 = vpow.pop %v989
        %v991 = vadd.f32 %v988, 1.0
        %v992 = vadd.f32 %v990, 1.0
        %v993 = vrcp.pop %v991
        %v994 = vmul.f32 %v991, %v993
        %v995 = vsub.f32 1.0, %v994
        %v996 = vmul.f32 %v993, %v995
        %v997 = vadd.f32 %v993, %v996
        %vm998 = vweird.f32 %v991
        %vm999 = vweird.f32 %v993
        %vm1000 = vmor %vm998, %vm999
        %v1001 = vsel %vm1000, %v993, %v997
        %v1002 = vand.u32 2147483647, %v991
        %vm1003 = vcmp.eq.f32.partialorder %v1002, 8.507059e+37
        %v1004 = vand.u32 %v991, 2147483648
        %v1005 = vor.u32 1.1754944e-38, %v1004
        %v1006 = vsel %vm1003, %v1005, %v1001
        %v1007 = vmul.f32 1.0, %v1006
        %v1008 = vrcp.pop %v992
        %v1009 = vmul.f32 %v992, %v1008
        %v1010 = vsub.f32 1.0, %v1009
        %v1011 = vmul.f32 %v1008, %v1010
        %v1012 = vadd.f32 %v1008, %v1011
        %vm1013 = vweird.f32 %v992
        %vm1014 = vweird.f32 %v1008
        %vm1015 = vmor %vm1013, %vm1014
        %v1016 = vsel %vm1015, %v1008, %v1012
        %v1017 = vand.u32 2147483647, %v992
        %vm1018 = vcmp.eq.f32.partialorder %v1017, 8.507059e+37
        %v1019 = vand.u32 %v992, 2147483648
        %v1020 = vor.u32 1.1754944e-38, %v1019
        %v1021 = vsel %vm1018, %v1020, %v1016
        %v1022 = vmul.f32 1.0, %v1021
        %v1025 = vrot.slane %v1022, 7
        %vm1026 = vcmask 1040384
        %v1027 = vsel %vm1026, %v1007, %v1025
        %v1029 = vlaneseq
        %vm1030 = vcmp.ge.s32.totalorder %v1029, 0
        %vm1031 = vcmp.lt.s32.totalorder %v1029, 256
        %vm1032 = vmand %vm1030, %vm1031
        %1033 = vst.msk [vmem:[%s274] sm:$0x3] %vm1032, %v1027
        %s1034 = sand.u32 %s183, 1
        %s1035 = scalar_lea.sflag [#allocation4], %s1034
        %s1036 = sand.u32 %s183, 1
        %s1037 = smul.addr %s1036, 2
        %s1038 = scalar_lea.vmem [#allocation3], %s1037
        // Predicated region
        $region49: #{deepfm_forward.1} parent=47 // pred_check
          %p1039 = pneg %p193
        $region50: #{deepfm_forward.1} parent=47 // pred_check_branch
          %1041 = sbr.rel (%p1039) target = $region52
        $region51: #{deepfm_forward.1} parent=47 // pred_region
          %s1042 = smul.u32 2, %s23
          %1044 = vsyncadd %s1035, 0
          %s1045 = scalar_lea.hbm %s7, %s1042
          %s1047 = sshll.u32 %s1038, 4
          %s1048 = int_to_ptr.vmem [resolvable:$true] %s1047
          %s1049 = sshll.u32 %s1045, 4
          %s1050 = int_to_ptr.hbm [resolvable:$true] %s1049
          %1052 = dma.vmem_to_hbm [thread:$0]  %s1048, 32, %s1050, %s1035
        $region52: #{deepfm_forward.1} parent=47 // pred_fallthru
          _
      $region48: #{deepfm_forward.1} parent=5 // pred_fallthru
        _
      %p1053 = scmp.le.s32.totalorder 2, %s18
      // Predicated region
      $region53: #{deepfm_forward.1} parent=5 // pred_check
        %p1054 = pneg %p1053
      $region54: #{deepfm_forward.1} parent=5 // pred_check_branch
        %1056 = sbr.rel (%p1054) target = $region56
      $region55: #{deepfm_forward.1} parent=5 // pred_region
        %s1057 = ssub.s32 %s18, 2
        // Predicated region
        $region57: #{deepfm_forward.1} parent=55 // pred_check
          %p1058 = pneg %p199
        $region58: #{deepfm_forward.1} parent=55 // pred_check_branch
          %1060 = sbr.rel (%p1058) target = $region60
        $region59: #{deepfm_forward.1} parent=55 // pred_region
          %s1061 = sand.u32 %s184, 1
          %s1062 = scalar_lea.sflag [#allocation4], %s1061
          %s1063 = sand.u32 %s184, 1
          %s1064 = smul.addr %s1063, 2
          %s1065 = scalar_lea.vmem [#allocation3], %s1064
          %1067 = dma.done %s1062, 32
        $region60: #{deepfm_forward.1} parent=55 // pred_fallthru
          _
      $region56: #{deepfm_forward.1} parent=5 // pred_fallthru
        _
    $region6: #{deepfm_forward.1} parent=1 // loop_footer
      %s22 = sadd.s32 1, %s18
    $region7: #{deepfm_forward.1} parent=1 // loop_footer_branch
      %17 = sbr.rel target = $region3
    $region8: #{deepfm_forward.1} parent=1 // loop_exit
      _
    %1068 = vsyncpa [#allocation4], 1
    %s1069 = scalar_lea.sflag [#allocation4], 1
    %1070 = vsyncpa %s1069, 1

</llo_original>
